<compile_context>
chip_gen: v7x
topology: tpu7x:2x2x1
jax: 0.10.0
libtpu: 0.0.40
codegen_flags: <defaults>
</compile_context>

<pallas_src>
import functools

import jax
import jax.numpy as jnp
from jax import lax
from jax.experimental import pallas as pl
from jax.experimental.pallas import tpu as pltpu


def _pick_rows(total, max_rows):
    """Largest row tile that keeps the BlockSpec legal: either the full axis
    or a divisor of it that is a multiple of 8 (TPU sublane constraint)."""
    if total <= max_rows:
        return total
    for t in range(min(max_rows, total), 7, -1):
        if total % t == 0 and t % 8 == 0:
            return t
    return total  # no legal tiling found; fall back to the whole axis


def _size_loss_kernel(logits_ref, tgt_ref, res_ref, oc_acc, cnt_acc, *,
                      margin, num_classes, pack):
    """Per-(batch, spatial-tile) SizeLoss core.

    logits_ref: (C, TNp, Wp) logits tile of one batch element (input dtype)
    tgt_ref:    (TNp, Wp)    lane-dense integer labels of the same tile
    res_ref:    (C, W)       f32 un-normalized penalty (before the [:, 1:])
    oc_acc:     (C, Wp)      f32 VMEM accumulator for output_counts
    cnt_acc:    (W,)         f32 SMEM accumulator for the label histogram
    """
    n = pl.program_id(1)
    W = num_classes

    @pl.when(n == 0)
    def _init():
        oc_acc[...] = jnp.zeros_like(oc_acc)
        for v in range(W):
            cnt_acc[v] = jnp.float32(0.0)

    # ---- softmax over channels + partial sum over this spatial tile --------
    x = logits_ref[...].astype(jnp.float32)              # (C, TNp, Wp)
    m = jnp.max(x, axis=0, keepdims=True)
    e = jnp.exp(x - m)
    inv = pl.reciprocal(jnp.sum(e, axis=0, keepdims=True), approx=False)
    sm = e * inv                                          # (C, TNp, Wp)
    oc_acc[...] += jnp.sum(sm, axis=1)                    # (C, Wp)

    # ---- label histogram on the lane-dense target tile ---------------------
    # Static unroll over the W label values; the per-value mask lives only in
    # vregs (no (M, W) one-hot is ever materialized).
    t = tgt_ref[...].astype(jnp.int32)                    # (TNp, Wp)
    for v in range(W):
        cnt_acc[v] = cnt_acc[v] + jnp.sum((t == v).astype(jnp.float32))

    # ---- finalize: fold lane groups, compute penalty, store -----------------
    @pl.when(n == pl.num_programs(1) - 1)
    def _finalize():
        oc_p = oc_acc[...]                                # (C, Wp)
        oc = oc_p[:, 0:W]
        for g in range(1, pack):                          # fold the k lane groups
            oc = oc + oc_p[:, g * W:(g + 1) * W]          # (C, W)

        lane = lax.broadcasted_iota(jnp.int32, (1, W), 1)
        counts = jnp.zeros((1, W), jnp.float32)
        for v in range(W):                                # assemble (1, W) row
            counts = jnp.where(lane == v, cnt_acc[v], counts)

        lower = counts * (1.0 - margin)
        upper = counts * (1.0 + margin)
        too_small = (oc < lower).astype(jnp.float32)
        too_big = (oc > upper).astype(jnp.float32)
        res_ref[...] = (too_small * (oc - lower) ** 2
                        + too_big * (oc - upper) ** 2)


def size_loss(output, target, margin=0.1, *, max_block_bytes=4 * 1024 * 1024):
    """Pallas implementation of SizeLoss.forward(output, target)."""
    B, C, D, H, W = output.shape
    N = D * H
    tgt_elems = 1
    for s in target.shape[1:]:
        tgt_elems *= s
    assert target.shape[0] == B and tgt_elems == N * W

    # Lane packing: fold spatial rows onto the lane axis while W < 128.
    k = 1
    if W < 128:
        k = max(1, 128 // W)
        while N % k:
            k -= 1
    Np, Wp = N // k, k * W

    # Keep HBM dtypes as given (no wrapper astype) — upcast happens in-kernel.
    out_resh = output.reshape(B, C, Np, Wp)
    tgt_resh = target.reshape(B, Np, Wp)

    itemsize = out_resh.dtype.itemsize
    max_rows = max(8, int(max_block_bytes) // max(1, C * Wp * itemsize))
    tnp = _pick_rows(Np, max_rows)
    num_n = Np // tnp

    kernel = functools.partial(_size_loss_kernel, margin=float(margin),
                               num_classes=W, pack=k)

    cost = pl.CostEstimate(
        flops=int(out_resh.size) * 6 + int(tgt_resh.size) * W * 2,
        transcendentals=int(out_resh.size),
        bytes_accessed=int(out_resh.size * out_resh.dtype.itemsize
                           + tgt_resh.size * tgt_resh.dtype.itemsize
                           + B * C * W * 4),
    )

    res = pl.pallas_call(
        kernel,
        out_shape=jax.ShapeDtypeStruct((B, C, W), jnp.float32),
        grid_spec=pltpu.PrefetchScalarGridSpec(
            num_scalar_prefetch=0,
            grid=(B, num_n),
            in_specs=[
                pl.BlockSpec((pl.Squeezed(), C, tnp, Wp),
                             lambda b, n: (b, 0, n, 0)),
                pl.BlockSpec((pl.Squeezed(), tnp, Wp),
                             lambda b, n: (b, n, 0)),
            ],
            out_specs=pl.BlockSpec((pl.Squeezed(), C, W),
                                   lambda b, n: (b, 0, 0)),
            scratch_shapes=[
                pltpu.VMEM((C, Wp), jnp.float32),   # output_counts accumulator
                pltpu.SMEM((W,), jnp.float32),      # label histogram accumulator
            ],
        ),
        compiler_params=pltpu.CompilerParams(
            dimension_semantics=("parallel", "arbitrary"),
            vmem_limit_bytes=64 * 1024 * 1024,
        ),
        cost_estimate=cost,
    )(out_resh, tgt_resh)

    # torch epilogue: res[:, 1:] / (D*H*W), then mean over everything.
    return jnp.mean(res[:, 1:, :] / float(D * H * W))


def _reference(output, target, margin=0.1):
    """Pure-JAX reference mirroring the torch code (same label assumption)."""
    B, C, D, H, W = output.shape
    sm = jax.nn.softmax(output, axis=1)
    oc = jnp.sum(sm, axis=(2, 3))                                  # (B, C, W)
    tflat = target.reshape(B, -1)
    counts = jnp.sum(
        (tflat[:, :, None] == jnp.arange(W)[None, None, :]).astype(jnp.float32),
        axis=1)                                                    # (B, W)
    tc = jnp.broadcast_to(counts[:, None, :], oc.shape)            # (B, C, W)
    lower = tc * (1.0 - margin)
    upper = tc * (1.0 + margin)
    too_small = (oc < lower).astype(jnp.float32)
    too_big = (oc > upper).astype(jnp.float32)
    ps = (oc - lower) ** 2
    pb = (oc - upper) ** 2
    res = too_small[:, 1:] * ps[:, 1:] + too_big[:, 1:] * pb[:, 1:]
    return jnp.mean(res / float(D * H * W))


if __name__ == "__main__":
    key = jax.random.PRNGKey(0)
    k1, k2, k3, k4 = jax.random.split(key, 4)

    # Test 1: small volume, single reduction step.
    B, C, D, H, W = 2, 4, 4, 8, 8
    output = jax.random.normal(k1, (B, C, D, H, W), dtype=jnp.float32)
    # integer labels in [0, W); force all W labels present per batch element so
    # that #unique(target[b]) == W, as the original torch broadcast requires.
    target = jax.random.randint(k2, (B, 1, D, H, W), 0, W, dtype=jnp.int32)
    target = target.at[:, 0, 0, 0, :W].set(jnp.arange(W, dtype=jnp.int32))

    loss = size_loss(output, target, margin=0.1)
    jax.block_until_ready(loss)
    ref = _reference(output, target, margin=0.1)
    assert jnp.allclose(loss, ref, rtol=1e-4, atol=1e-4), (loss, ref)

    # Test 2: force multiple reduction steps over the spatial axis so the
    # accumulator init / accumulate / finalize path is exercised.
    B2, C2, D2, H2, W2 = 2, 3, 8, 32, 8
    output2 = jax.random.normal(k3, (B2, C2, D2, H2, W2), dtype=jnp.float32)
    target2 = jax.random.randint(k4, (B2, 1, D2, H2, W2), 0, W2, dtype=jnp.int32)
    target2 = target2.at[:, 0, 0, 0, :W2].set(jnp.arange(W2, dtype=jnp.int32))

    loss2 = size_loss(output2, target2, margin=0.1,
                      max_block_bytes=8 * C2 * 128 * 4)   # -> 2 grid steps over Np
    jax.block_until_ready(loss2)
    ref2 = _reference(output2, target2, margin=0.1)
    assert jnp.allclose(loss2, ref2, rtol=1e-4, atol=1e-4), (loss2, ref2)

    print("KERNEL_OK")
</pallas_src>

<mosaic_0001>
module attributes {stable_mosaic.version = 11 : i64} {
  func.func @_size_loss_kernel(%arg0: i32, %arg1: i32, %arg2: memref<1x4x2x128xf32, #tpu.memory_space<vmem>>, %arg3: memref<1x2x128xi32, #tpu.memory_space<vmem>>, %arg4: memref<1x4x8xf32, #tpu.memory_space<vmem>>, %arg5: memref<4x128xf32, #tpu.memory_space<vmem>>, %arg6: memref<8xf32, #tpu.memory_space<smem>>) attributes {dimension_semantics = [#tpu.dimension_semantics<parallel>, #tpu.dimension_semantics<arbitrary>], iteration_bounds = array<i64: 2, 1>, scalar_prefetch = 0 : i64, scratch_operands = 2 : i64, tpu.core_type = #tpu.core_type<tc>, window_params = [{transform_indices = @transform_0, window_bounds = array<i64: 1, 4, 2, 128>}, {transform_indices = @transform_1, window_bounds = array<i64: 1, 2, 128>}, {transform_indices = @transform_2, window_bounds = array<i64: 1, 4, 8>}]} {
    %c0_i32 = arith.constant 0 : i32
    %0 = arith.cmpi eq, %arg1, %c0_i32 : i32
    %1 = arith.extui %0 : i1 to i32
    %c0_i32_0 = arith.constant 0 : i32
    %2 = arith.cmpi ne, %1, %c0_i32_0 : i32
    scf.if %2 {
      %cst_33 = arith.constant 0.000000e+00 : f32
      %112 = vector.broadcast %cst_33 : f32 to vector<4x128xf32>
      %c0_34 = arith.constant 0 : index
      %c0_35 = arith.constant 0 : index
      %113 = vector.load %arg5[%c0_34, %c0_35] : memref<4x128xf32, #tpu.memory_space<vmem>>, vector<4x128xf32>
      tpu.vector_store %arg5[%c0_34, %c0_35], %112 {strides = array<i32>} : memref<4x128xf32, #tpu.memory_space<vmem>>, vector<4x128xf32>,
      %cst_36 = arith.constant 0.000000e+00 : f32
      %c0_37 = arith.constant 0 : index
      %114 = memref.load %arg6[%c0_37] : memref<8xf32, #tpu.memory_space<smem>>
      memref.store %cst_36, %arg6[%c0_37] : memref<8xf32, #tpu.memory_space<smem>>
      %cst_38 = arith.constant 0.000000e+00 : f32
      %c1_39 = arith.constant 1 : index
      %115 = memref.load %arg6[%c1_39] : memref<8xf32, #tpu.memory_space<smem>>
      memref.store %cst_38, %arg6[%c1_39] : memref<8xf32, #tpu.memory_space<smem>>
      %cst_40 = arith.constant 0.000000e+00 : f32
      %c2_41 = arith.constant 2 : index
      %116 = memref.load %arg6[%c2_41] : memref<8xf32, #tpu.memory_space<smem>>
      memref.store %cst_40, %arg6[%c2_41] : memref<8xf32, #tpu.memory_space<smem>>
      %cst_42 = arith.constant 0.000000e+00 : f32
      %c3_43 = arith.constant 3 : index
      %117 = memref.load %arg6[%c3_43] : memref<8xf32, #tpu.memory_space<smem>>
      memref.store %cst_42, %arg6[%c3_43] : memref<8xf32, #tpu.memory_space<smem>>
      %cst_44 = arith.constant 0.000000e+00 : f32
      %c4_45 = arith.constant 4 : index
      %118 = memref.load %arg6[%c4_45] : memref<8xf32, #tpu.memory_space<smem>>
      memref.store %cst_44, %arg6[%c4_45] : memref<8xf32, #tpu.memory_space<smem>>
      %cst_46 = arith.constant 0.000000e+00 : f32
      %c5_47 = arith.constant 5 : index
      %119 = memref.load %arg6[%c5_47] : memref<8xf32, #tpu.memory_space<smem>>
      memref.store %cst_46, %arg6[%c5_47] : memref<8xf32, #tpu.memory_space<smem>>
      %cst_48 = arith.constant 0.000000e+00 : f32
      %c6_49 = arith.constant 6 : index
      %120 = memref.load %arg6[%c6_49] : memref<8xf32, #tpu.memory_space<smem>>
      memref.store %cst_48, %arg6[%c6_49] : memref<8xf32, #tpu.memory_space<smem>>
      %cst_50 = arith.constant 0.000000e+00 : f32
      %c7_51 = arith.constant 7 : index
      %121 = memref.load %arg6[%c7_51] : memref<8xf32, #tpu.memory_space<smem>>
      memref.store %cst_50, %arg6[%c7_51] : memref<8xf32, #tpu.memory_space<smem>>
    } else {
    }
    %c0 = arith.constant 0 : index
    %c0_1 = arith.constant 0 : index
    %c0_2 = arith.constant 0 : index
    %c0_3 = arith.constant 0 : index
    %3 = vector.load %arg2[%c0, %c0_1, %c0_2, %c0_3] : memref<1x4x2x128xf32, #tpu.memory_space<vmem>>, vector<1x4x2x128xf32>
    %4 = vector.shape_cast %3 : vector<1x4x2x128xf32> to vector<4x2x128xf32>
    %cst = arith.constant dense<0xFF800000> : vector<2x128xf32>
    %5 = vector.multi_reduction <maximumf>, %4, %cst [0] : vector<4x2x128xf32> to vector<2x128xf32>
    %6 = vector.shape_cast %5 : vector<2x128xf32> to vector<1x2x128xf32>
    %7 = vector.broadcast %6 : vector<1x2x128xf32> to vector<4x2x128xf32>
    %8 = arith.subf %4, %7 : vector<4x2x128xf32>
    %9 = math.exp %8 : vector<4x2x128xf32>
    %cst_4 = arith.constant dense<0.000000e+00> : vector<2x128xf32>
    %10 = vector.multi_reduction <add>, %9, %cst_4 [0] : vector<4x2x128xf32> to vector<2x128xf32>
    %11 = vector.shape_cast %10 : vector<2x128xf32> to vector<1x2x128xf32>
    %12 = tpu.reciprocal %11 : vector<1x2x128xf32> -> vector<1x2x128xf32>
    %13 = vector.broadcast %12 : vector<1x2x128xf32> to vector<4x2x128xf32>
    %14 = arith.mulf %9, %13 : vector<4x2x128xf32>
    %c0_5 = arith.constant 0 : index
    %c0_6 = arith.constant 0 : index
    %15 = vector.load %arg5[%c0_5, %c0_6] : memref<4x128xf32, #tpu.memory_space<vmem>>, vector<4x128xf32>
    %cst_7 = arith.constant dense<0.000000e+00> : vector<4x128xf32>
    %16 = vector.multi_reduction <add>, %14, %cst_7 [1] : vector<4x2x128xf32> to vector<4x128xf32>
    %17 = arith.addf %15, %16 : vector<4x128xf32>
    %c0_8 = arith.constant 0 : index
    %c0_9 = arith.constant 0 : index
    %18 = vector.load %arg5[%c0_8, %c0_9] : memref<4x128xf32, #tpu.memory_space<vmem>>, vector<4x128xf32>
    tpu.vector_store %arg5[%c0_8, %c0_9], %17 {strides = array<i32>} : memref<4x128xf32, #tpu.memory_space<vmem>>, vector<4x128xf32>,
    %c0_10 = arith.constant 0 : index
    %c0_11 = arith.constant 0 : index
    %c0_12 = arith.constant 0 : index
    %19 = vector.load %arg3[%c0_10, %c0_11, %c0_12] : memref<1x2x128xi32, #tpu.memory_space<vmem>>, vector<1x2x128xi32>
    %20 = vector.shape_cast %19 : vector<1x2x128xi32> to vector<2x128xi32>
    %c0_13 = arith.constant 0 : index
    %21 = memref.load %arg6[%c0_13] : memref<8xf32, #tpu.memory_space<smem>>
    %c0_i32_14 = arith.constant 0 : i32
    %22 = vector.broadcast %c0_i32_14 : i32 to vector<2x128xi32>
    %23 = arith.cmpi eq, %20, %22 : vector<2x128xi32>
    %24 = arith.extui %23 : vector<2x128xi1> to vector<2x128xi32>
    %25 = arith.sitofp %24 : vector<2x128xi32> to vector<2x128xf32>
    %26 = vector.shape_cast %25 : vector<2x128xf32> to vector<1x2x128xf32>
    %cst_15 = arith.constant dense<0.000000e+00> : vector<1xf32>
    %27 = vector.multi_reduction <add>, %26, %cst_15 [1, 2] : vector<1x2x128xf32> to vector<1xf32>
    %28 = vector.shape_cast %27 : vector<1xf32> to vector<1x1x1xf32>
    %29 = vector.extract %28[0, 0, 0] : f32 from vector<1x1x1xf32>
    %30 = arith.addf %21, %29 : f32
    %c0_16 = arith.constant 0 : index
    %31 = memref.load %arg6[%c0_16] : memref<8xf32, #tpu.memory_space<smem>>
    memref.store %30, %arg6[%c0_16] : memref<8xf32, #tpu.memory_space<smem>>
    %c1 = arith.constant 1 : index
    %32 = memref.load %arg6[%c1] : memref<8xf32, #tpu.memory_space<smem>>
    %c1_i32 = arith.constant 1 : i32
    %33 = vector.broadcast %c1_i32 : i32 to vector<2x128xi32>
    %34 = arith.cmpi eq, %20, %33 : vector<2x128xi32>
    %35 = arith.extui %34 : vector<2x128xi1> to vector<2x128xi32>
    %36 = arith.sitofp %35 : vector<2x128xi32> to vector<2x128xf32>
    %37 = vector.shape_cast %36 : vector<2x128xf32> to vector<1x2x128xf32>
    %cst_17 = arith.constant dense<0.000000e+00> : vector<1xf32>
    %38 = vector.multi_reduction <add>, %37, %cst_17 [1, 2] : vector<1x2x128xf32> to vector<1xf32>
    %39 = vector.shape_cast %38 : vector<1xf32> to vector<1x1x1xf32>
    %40 = vector.extract %39[0, 0, 0] : f32 from vector<1x1x1xf32>
    %41 = arith.addf %32, %40 : f32
    %c1_18 = arith.constant 1 : index
    %42 = memref.load %arg6[%c1_18] : memref<8xf32, #tpu.memory_space<smem>>
    memref.store %41, %arg6[%c1_18] : memref<8xf32, #tpu.memory_space<smem>>
    %c2 = arith.constant 2 : index
    %43 = memref.load %arg6[%c2] : memref<8xf32, #tpu.memory_space<smem>>
    %c2_i32 = arith.constant 2 : i32
    %44 = vector.broadcast %c2_i32 : i32 to vector<2x128xi32>
    %45 = arith.cmpi eq, %20, %44 : vector<2x128xi32>
    %46 = arith.extui %45 : vector<2x128xi1> to vector<2x128xi32>
    %47 = arith.sitofp %46 : vector<2x128xi32> to vector<2x128xf32>
    %48 = vector.shape_cast %47 : vector<2x128xf32> to vector<1x2x128xf32>
    %cst_19 = arith.constant dense<0.000000e+00> : vector<1xf32>
    %49 = vector.multi_reduction <add>, %48, %cst_19 [1, 2] : vector<1x2x128xf32> to vector<1xf32>
    %50 = vector.shape_cast %49 : vector<1xf32> to vector<1x1x1xf32>
    %51 = vector.extract %50[0, 0, 0] : f32 from vector<1x1x1xf32>
    %52 = arith.addf %43, %51 : f32
    %c2_20 = arith.constant 2 : index
    %53 = memref.load %arg6[%c2_20] : memref<8xf32, #tpu.memory_space<smem>>
    memref.store %52, %arg6[%c2_20] : memref<8xf32, #tpu.memory_space<smem>>
    %c3 = arith.constant 3 : index
    %54 = memref.load %arg6[%c3] : memref<8xf32, #tpu.memory_space<smem>>
    %c3_i32 = arith.constant 3 : i32
    %55 = vector.broadcast %c3_i32 : i32 to vector<2x128xi32>
    %56 = arith.cmpi eq, %20, %55 : vector<2x128xi32>
    %57 = arith.extui %56 : vector<2x128xi1> to vector<2x128xi32>
    %58 = arith.sitofp %57 : vector<2x128xi32> to vector<2x128xf32>
    %59 = vector.shape_cast %58 : vector<2x128xf32> to vector<1x2x128xf32>
    %cst_21 = arith.constant dense<0.000000e+00> : vector<1xf32>
    %60 = vector.multi_reduction <add>, %59, %cst_21 [1, 2] : vector<1x2x128xf32> to vector<1xf32>
    %61 = vector.shape_cast %60 : vector<1xf32> to vector<1x1x1xf32>
    %62 = vector.extract %61[0, 0, 0] : f32 from vector<1x1x1xf32>
    %63 = arith.addf %54, %62 : f32
    %c3_22 = arith.constant 3 : index
    %64 = memref.load %arg6[%c3_22] : memref<8xf32, #tpu.memory_space<smem>>
    memref.store %63, %arg6[%c3_22] : memref<8xf32, #tpu.memory_space<smem>>
    %c4 = arith.constant 4 : index
    %65 = memref.load %arg6[%c4] : memref<8xf32, #tpu.memory_space<smem>>
    %c4_i32 = arith.constant 4 : i32
    %66 = vector.broadcast %c4_i32 : i32 to vector<2x128xi32>
    %67 = arith.cmpi eq, %20, %66 : vector<2x128xi32>
    %68 = arith.extui %67 : vector<2x128xi1> to vector<2x128xi32>
    %69 = arith.sitofp %68 : vector<2x128xi32> to vector<2x128xf32>
    %70 = vector.shape_cast %69 : vector<2x128xf32> to vector<1x2x128xf32>
    %cst_23 = arith.constant dense<0.000000e+00> : vector<1xf32>
    %71 = vector.multi_reduction <add>, %70, %cst_23 [1, 2] : vector<1x2x128xf32> to vector<1xf32>
    %72 = vector.shape_cast %71 : vector<1xf32> to vector<1x1x1xf32>
    %73 = vector.extract %72[0, 0, 0] : f32 from vector<1x1x1xf32>
    %74 = arith.addf %65, %73 : f32
    %c4_24 = arith.constant 4 : index
    %75 = memref.load %arg6[%c4_24] : memref<8xf32, #tpu.memory_space<smem>>
    memref.store %74, %arg6[%c4_24] : memref<8xf32, #tpu.memory_space<smem>>
    %c5 = arith.constant 5 : index
    %76 = memref.load %arg6[%c5] : memref<8xf32, #tpu.memory_space<smem>>
    %c5_i32 = arith.constant 5 : i32
    %77 = vector.broadcast %c5_i32 : i32 to vector<2x128xi32>
    %78 = arith.cmpi eq, %20, %77 : vector<2x128xi32>
    %79 = arith.extui %78 : vector<2x128xi1> to vector<2x128xi32>
    %80 = arith.sitofp %79 : vector<2x128xi32> to vector<2x128xf32>
    %81 = vector.shape_cast %80 : vector<2x128xf32> to vector<1x2x128xf32>
    %cst_25 = arith.constant dense<0.000000e+00> : vector<1xf32>
    %82 = vector.multi_reduction <add>, %81, %cst_25 [1, 2] : vector<1x2x128xf32> to vector<1xf32>
    %83 = vector.shape_cast %82 : vector<1xf32> to vector<1x1x1xf32>
    %84 = vector.extract %83[0, 0, 0] : f32 from vector<1x1x1xf32>
    %85 = arith.addf %76, %84 : f32
    %c5_26 = arith.constant 5 : index
    %86 = memref.load %arg6[%c5_26] : memref<8xf32, #tpu.memory_space<smem>>
    memref.store %85, %arg6[%c5_26] : memref<8xf32, #tpu.memory_space<smem>>
    %c6 = arith.constant 6 : index
    %87 = memref.load %arg6[%c6] : memref<8xf32, #tpu.memory_space<smem>>
    %c6_i32 = arith.constant 6 : i32
    %88 = vector.broadcast %c6_i32 : i32 to vector<2x128xi32>
    %89 = arith.cmpi eq, %20, %88 : vector<2x128xi32>
    %90 = arith.extui %89 : vector<2x128xi1> to vector<2x128xi32>
    %91 = arith.sitofp %90 : vector<2x128xi32> to vector<2x128xf32>
    %92 = vector.shape_cast %91 : vector<2x128xf32> to vector<1x2x128xf32>
    %cst_27 = arith.constant dense<0.000000e+00> : vector<1xf32>
    %93 = vector.multi_reduction <add>, %92, %cst_27 [1, 2] : vector<1x2x128xf32> to vector<1xf32>
    %94 = vector.shape_cast %93 : vector<1xf32> to vector<1x1x1xf32>
    %95 = vector.extract %94[0, 0, 0] : f32 from vector<1x1x1xf32>
    %96 = arith.addf %87, %95 : f32
    %c6_28 = arith.constant 6 : index
    %97 = memref.load %arg6[%c6_28] : memref<8xf32, #tpu.memory_space<smem>>
    memref.store %96, %arg6[%c6_28] : memref<8xf32, #tpu.memory_space<smem>>
    %c7 = arith.constant 7 : index
    %98 = memref.load %arg6[%c7] : memref<8xf32, #tpu.memory_space<smem>>
    %c7_i32 = arith.constant 7 : i32
    %99 = vector.broadcast %c7_i32 : i32 to vector<2x128xi32>
    %100 = arith.cmpi eq, %20, %99 : vector<2x128xi32>
    %101 = arith.extui %100 : vector<2x128xi1> to vector<2x128xi32>
    %102 = arith.sitofp %101 : vector<2x128xi32> to vector<2x128xf32>
    %103 = vector.shape_cast %102 : vector<2x128xf32> to vector<1x2x128xf32>
    %cst_29 = arith.constant dense<0.000000e+00> : vector<1xf32>
    %104 = vector.multi_reduction <add>, %103, %cst_29 [1, 2] : vector<1x2x128xf32> to vector<1xf32>
    %105 = vector.shape_cast %104 : vector<1xf32> to vector<1x1x1xf32>
    %106 = vector.extract %105[0, 0, 0] : f32 from vector<1x1x1xf32>
    %107 = arith.addf %98, %106 : f32
    %c7_30 = arith.constant 7 : index
    %108 = memref.load %arg6[%c7_30] : memref<8xf32, #tpu.memory_space<smem>>
    memref.store %107, %arg6[%c7_30] : memref<8xf32, #tpu.memory_space<smem>>
    %c0_i32_31 = arith.constant 0 : i32
    %109 = arith.cmpi eq, %arg1, %c0_i32_31 : i32
    %110 = arith.extui %109 : i1 to i32
    %c0_i32_32 = arith.constant 0 : i32
    %111 = arith.cmpi ne, %110, %c0_i32_32 : i32
    scf.if %111 {
      %c0_33 = arith.constant 0 : index
      %c0_34 = arith.constant 0 : index
      %112 = vector.load %arg5[%c0_33, %c0_34] : memref<4x128xf32, #tpu.memory_space<vmem>>, vector<4x128xf32>
      %113 = vector.extract_strided_slice %112 {offsets = [0, 0], sizes = [4, 8], strides = [1, 1]} : vector<4x128xf32> to vector<4x8xf32>
      %114 = vector.extract_strided_slice %112 {offsets = [0, 8], sizes = [4, 8], strides = [1, 1]} : vector<4x128xf32> to vector<4x8xf32>
      %115 = arith.addf %113, %114 : vector<4x8xf32>
      %116 = vector.extract_strided_slice %112 {offsets = [0, 16], sizes = [4, 8], strides = [1, 1]} : vector<4x128xf32> to vector<4x8xf32>
      %117 = arith.addf %115, %116 : vector<4x8xf32>
      %118 = vector.extract_strided_slice %112 {offsets = [0, 24], sizes = [4, 8], strides = [1, 1]} : vector<4x128xf32> to vector<4x8xf32>
      %119 = arith.addf %117, %118 : vector<4x8xf32>
      %120 = vector.extract_strided_slice %112 {offsets = [0, 32], sizes = [4, 8], strides = [1, 1]} : vector<4x128xf32> to vector<4x8xf32>
      %121 = arith.addf %119, %120 : vector<4x8xf32>
      %122 = vector.extract_strided_slice %112 {offsets = [0, 40], sizes = [4, 8], strides = [1, 1]} : vector<4x128xf32> to vector<4x8xf32>
      %123 = arith.addf %121, %122 : vector<4x8xf32>
      %124 = vector.extract_strided_slice %112 {offsets = [0, 48], sizes = [4, 8], strides = [1, 1]} : vector<4x128xf32> to vector<4x8xf32>
      %125 = arith.addf %123, %124 : vector<4x8xf32>
      %126 = vector.extract_strided_slice %112 {offsets = [0, 56], sizes = [4, 8], strides = [1, 1]} : vector<4x128xf32> to vector<4x8xf32>
      %127 = arith.addf %125, %126 : vector<4x8xf32>
      %128 = vector.extract_strided_slice %112 {offsets = [0, 64], sizes = [4, 8], strides = [1, 1]} : vector<4x128xf32> to vector<4x8xf32>
      %129 = arith.addf %127, %128 : vector<4x8xf32>
      %130 = vector.extract_strided_slice %112 {offsets = [0, 72], sizes = [4, 8], strides = [1, 1]} : vector<4x128xf32> to vector<4x8xf32>
      %131 = arith.addf %129, %130 : vector<4x8xf32>
      %132 = vector.extract_strided_slice %112 {offsets = [0, 80], sizes = [4, 8], strides = [1, 1]} : vector<4x128xf32> to vector<4x8xf32>
      %133 = arith.addf %131, %132 : vector<4x8xf32>
      %134 = vector.extract_strided_slice %112 {offsets = [0, 88], sizes = [4, 8], strides = [1, 1]} : vector<4x128xf32> to vector<4x8xf32>
      %135 = arith.addf %133, %134 : vector<4x8xf32>
      %136 = vector.extract_strided_slice %112 {offsets = [0, 96], sizes = [4, 8], strides = [1, 1]} : vector<4x128xf32> to vector<4x8xf32>
      %137 = arith.addf %135, %136 : vector<4x8xf32>
      %138 = vector.extract_strided_slice %112 {offsets = [0, 104], sizes = [4, 8], strides = [1, 1]} : vector<4x128xf32> to vector<4x8xf32>
      %139 = arith.addf %137, %138 : vector<4x8xf32>
      %140 = vector.extract_strided_slice %112 {offsets = [0, 112], sizes = [4, 8], strides = [1, 1]} : vector<4x128xf32> to vector<4x8xf32>
      %141 = arith.addf %139, %140 : vector<4x8xf32>
      %142 = vector.extract_strided_slice %112 {offsets = [0, 120], sizes = [4, 8], strides = [1, 1]} : vector<4x128xf32> to vector<4x8xf32>
      %143 = arith.addf %141, %142 : vector<4x8xf32>
      %144 = tpu.iota {dimensions = array<i32: 1>} : vector<1x8xi32>
      %cst_35 = arith.constant 0.000000e+00 : f32
      %145 = vector.broadcast %cst_35 : f32 to vector<1x8xf32>
      %c0_i32_36 = arith.constant 0 : i32
      %146 = vector.broadcast %c0_i32_36 : i32 to vector<1x8xi32>
      %147 = arith.cmpi eq, %144, %146 : vector<1x8xi32>
      %c0_37 = arith.constant 0 : index
      %148 = memref.load %arg6[%c0_37] : memref<8xf32, #tpu.memory_space<smem>>
      %149 = vector.broadcast %148 : f32 to vector<1x8xf32>
      %150 = arith.select %147, %149, %145 : vector<1x8xi1>, vector<1x8xf32>
      %c1_i32_38 = arith.constant 1 : i32
      %151 = vector.broadcast %c1_i32_38 : i32 to vector<1x8xi32>
      %152 = arith.cmpi eq, %144, %151 : vector<1x8xi32>
      %c1_39 = arith.constant 1 : index
      %153 = memref.load %arg6[%c1_39] : memref<8xf32, #tpu.memory_space<smem>>
      %154 = vector.broadcast %153 : f32 to vector<1x8xf32>
      %155 = arith.select %152, %154, %150 : vector<1x8xi1>, vector<1x8xf32>
      %c2_i32_40 = arith.constant 2 : i32
      %156 = vector.broadcast %c2_i32_40 : i32 to vector<1x8xi32>
      %157 = arith.cmpi eq, %144, %156 : vector<1x8xi32>
      %c2_41 = arith.constant 2 : index
      %158 = memref.load %arg6[%c2_41] : memref<8xf32, #tpu.memory_space<smem>>
      %159 = vector.broadcast %158 : f32 to vector<1x8xf32>
      %160 = arith.select %157, %159, %155 : vector<1x8xi1>, vector<1x8xf32>
      %c3_i32_42 = arith.constant 3 : i32
      %161 = vector.broadcast %c3_i32_42 : i32 to vector<1x8xi32>
      %162 = arith.cmpi eq, %144, %161 : vector<1x8xi32>
      %c3_43 = arith.constant 3 : index
      %163 = memref.load %arg6[%c3_43] : memref<8xf32, #tpu.memory_space<smem>>
      %164 = vector.broadcast %163 : f32 to vector<1x8xf32>
      %165 = arith.select %162, %164, %160 : vector<1x8xi1>, vector<1x8xf32>
      %c4_i32_44 = arith.constant 4 : i32
      %166 = vector.broadcast %c4_i32_44 : i32 to vector<1x8xi32>
      %167 = arith.cmpi eq, %144, %166 : vector<1x8xi32>
      %c4_45 = arith.constant 4 : index
      %168 = memref.load %arg6[%c4_45] : memref<8xf32, #tpu.memory_space<smem>>
      %169 = vector.broadcast %168 : f32 to vector<1x8xf32>
      %170 = arith.select %167, %169, %165 : vector<1x8xi1>, vector<1x8xf32>
      %c5_i32_46 = arith.constant 5 : i32
      %171 = vector.broadcast %c5_i32_46 : i32 to vector<1x8xi32>
      %172 = arith.cmpi eq, %144, %171 : vector<1x8xi32>
      %c5_47 = arith.constant 5 : index
      %173 = memref.load %arg6[%c5_47] : memref<8xf32, #tpu.memory_space<smem>>
      %174 = vector.broadcast %173 : f32 to vector<1x8xf32>
      %175 = arith.select %172, %174, %170 : vector<1x8xi1>, vector<1x8xf32>
      %c6_i32_48 = arith.constant 6 : i32
      %176 = vector.broadcast %c6_i32_48 : i32 to vector<1x8xi32>
      %177 = arith.cmpi eq, %144, %176 : vector<1x8xi32>
      %c6_49 = arith.constant 6 : index
      %178 = memref.load %arg6[%c6_49] : memref<8xf32, #tpu.memory_space<smem>>
      %179 = vector.broadcast %178 : f32 to vector<1x8xf32>
      %180 = arith.select %177, %179, %175 : vector<1x8xi1>, vector<1x8xf32>
      %c7_i32_50 = arith.constant 7 : i32
      %181 = vector.broadcast %c7_i32_50 : i32 to vector<1x8xi32>
      %182 = arith.cmpi eq, %144, %181 : vector<1x8xi32>
      %c7_51 = arith.constant 7 : index
      %183 = memref.load %arg6[%c7_51] : memref<8xf32, #tpu.memory_space<smem>>
      %184 = vector.broadcast %183 : f32 to vector<1x8xf32>
      %185 = arith.select %182, %184, %180 : vector<1x8xi1>, vector<1x8xf32>
      %cst_52 = arith.constant 0.899999976 : f32
      %186 = vector.broadcast %cst_52 : f32 to vector<1x8xf32>
      %187 = arith.mulf %185, %186 : vector<1x8xf32>
      %cst_53 = arith.constant 1.100000e+00 : f32
      %188 = vector.broadcast %cst_53 : f32 to vector<1x8xf32>
      %189 = arith.mulf %185, %188 : vector<1x8xf32>
      %190 = vector.broadcast %187 : vector<1x8xf32> to vector<4x8xf32>
      %191 = arith.cmpf olt, %143, %190 : vector<4x8xf32>
      %192 = arith.extui %191 : vector<4x8xi1> to vector<4x8xi32>
      %193 = arith.sitofp %192 : vector<4x8xi32> to vector<4x8xf32>
      %194 = vector.broadcast %189 : vector<1x8xf32> to vector<4x8xf32>
      %195 = arith.cmpf ogt, %143, %194 : vector<4x8xf32>
      %196 = arith.extui %195 : vector<4x8xi1> to vector<4x8xi32>
      %197 = arith.sitofp %196 : vector<4x8xi32> to vector<4x8xf32>
      %198 = vector.broadcast %187 : vector<1x8xf32> to vector<4x8xf32>
      %199 = arith.subf %143, %198 : vector<4x8xf32>
      %200 = arith.mulf %199, %199 : vector<4x8xf32>
      %201 = arith.mulf %193, %200 : vector<4x8xf32>
      %202 = vector.broadcast %189 : vector<1x8xf32> to vector<4x8xf32>
      %203 = arith.subf %143, %202 : vector<4x8xf32>
      %204 = arith.mulf %203, %203 : vector<4x8xf32>
      %205 = arith.mulf %197, %204 : vector<4x8xf32>
      %206 = arith.addf %201, %205 : vector<4x8xf32>
      %c0_54 = arith.constant 0 : index
      %c0_55 = arith.constant 0 : index
      %c0_56 = arith.constant 0 : index
      %207 = vector.load %arg4[%c0_54, %c0_55, %c0_56] : memref<1x4x8xf32, #tpu.memory_space<vmem>>, vector<1x4x8xf32>
      %208 = vector.shape_cast %207 : vector<1x4x8xf32> to vector<4x8xf32>
      %209 = vector.shape_cast %206 : vector<4x8xf32> to vector<1x4x8xf32>
      tpu.vector_store %arg4[%c0_54, %c0_55, %c0_56], %209 {strides = array<i32>} : memref<1x4x8xf32, #tpu.memory_space<vmem>>, vector<1x4x8xf32>,
    } else {
    }
    return
  }
  func.func @transform_0(%arg0: i32, %arg1: i32) -> (i32, i32, i32, i32) {
    %c0_i32 = arith.constant 0 : i32
    %c0_i32_0 = arith.constant 0 : i32
    %c0_i32_1 = arith.constant 0 : i32
    return %arg0, %c0_i32, %arg1, %c0_i32_0 : i32, i32, i32, i32
  }
  func.func @transform_1(%arg0: i32, %arg1: i32) -> (i32, i32, i32) {
    %c0_i32 = arith.constant 0 : i32
    %c0_i32_0 = arith.constant 0 : i32
    return %arg0, %arg1, %c0_i32 : i32, i32, i32
  }
  func.func @transform_2(%arg0: i32, %arg1: i32) -> (i32, i32, i32) {
    %c0_i32 = arith.constant 0 : i32
    %c0_i32_0 = arith.constant 0 : i32
    %c0_i32_1 = arith.constant 0 : i32
    return %arg0, %c0_i32, %c0_i32_0 : i32, i32, i32
  }
}

</mosaic_0001>

<llo_original>
// kernel: tpu_custom_call.1
$region0: #{tpu_custom_call.1}
  #allocation0 [shape = 'u32[]', space=smem, size = 0x4, offset = 0x4, fixed_abs, tag = 'smem constant byte address 0x4 - core index']
  #allocation1 [shape = 'u32[144,128]{1,0:T(1,128)}', space=vmem, size = 0x12000, scoped, tag = 'internal scratch']
  #allocation2 [shape = 'f32[4,128]{1,0:T(4,128)}', space=vmem, size = 0x800, scoped, tag = 'scratch operand']
  #allocation3 [shape = 'f32[8]{0:T(128)}', space=smem, size = 0x200, scoped, tag = 'scratch operand']
  %s0 = inlined_call_operand.hbm [shape: f32[2,4,2,128], index: 0, kind: input, shape index: {}]
  %s1 = inlined_call_operand.hbm [shape: s32[2,2,128], index: 1, kind: input, shape index: {}]
  %s2 = inlined_call_operand.hbm [shape: f32[2,4,8], index: 2, kind: output, shape index: {}]
  %s3 = sld [smem:[#allocation0]]
  $region57: #{tpu_custom_call.1} parent=0
    _
  %s5 = ssub.s32 1, %s3
  %s6 = scalar_select 0, %s5, %s3
  $region1: #{tpu_custom_call.1} parent=0
    #allocation4 [shape = 'u8[8192]{0}', space=vmem, size = 0x2000, scoped, tag = 'input window, operand 0']
    #allocation5 [shape = 's32[2]{0}', space=sflag, size = 0x8, scoped, tag = 'scoped memory for tpu_custom_call.1']
    #allocation6 [shape = 's32[2]{0}', space=sflag, size = 0x8, scoped, tag = 'scoped memory for tpu_custom_call.1']
    #allocation7 [shape = 'u8[2048]{0}', space=vmem, size = 0x800, scoped, tag = 'input window, operand 1']
    #allocation8 [shape = 's32[2]{0}', space=sflag, size = 0x8, scoped, tag = 'scoped memory for tpu_custom_call.1']
    #allocation9 [shape = 'u8[4096]{0}', space=vmem, size = 0x1000, scoped, tag = 'output window, operand 0']
    %7 = vsyncpa [#allocation5], 0
    %s8 = scalar_lea.sflag [#allocation5], 1
    %9 = vsyncpa %s8, 0
    %10 = vsyncpa [#allocation8], 0
    %s11 = scalar_lea.sflag [#allocation8], 1
    %12 = vsyncpa %s11, 0
    %13 = vsyncpa [#allocation6], 0
    %s14 = scalar_lea.sflag [#allocation6], 1
    %15 = vsyncpa %s14, 0
    loop: start=0, step=1, limit=4
    $region2: #{tpu_custom_call.1} parent=1 // loop_pre_header
      _
    $region3: #{tpu_custom_call.1} parent=1 // loop_header
      %s17 = sphi 0, %s21
      %p18 = scmp.ge.s32.totalorder %s17, 4
      %s24 = sphi 0, %s36
      %s25 = sphi 0, %s32
      %s26 = sphi 0, %s24
      %s27 = sphi 0, %s25
      %s28 = sphi 0, %s26
      %s29 = sphi 0, %s27
      %s41 = sphi 0, %s43
      %s44 = sphi 0, %s41
      %s45 = sphi 0, %s44
      %s61 = sphi 0, %s45
      %s69 = sphi 0, %s71
      %s72 = sphi 0, %s69
      %s73 = sphi 0, %s72
      %s89 = sphi 0, %s73
      %s95 = sphi 0, %s97
      %s98 = sphi 0, %s95
      %s99 = sphi 0, %s98
      %s115 = sphi 0, %s99
    $region4: #{tpu_custom_call.1} parent=1 // loop_header_branch
      %20 = sbr.rel (%p18) target = $region8
    $region5: #{tpu_custom_call.1} parent=1 // loop_body
      %s22 = ssub.s32 %s17, 1
      %s23 = ssub.s32 %s17, 2
      %s30 = sadd.s32 1, %s25
      %p31 = scmp.ge.s32.totalorder %s30, 1
      %s32 = scalar_select %p31, 0, %s30
      %s33 = sadd.s32 1, %s24
      %s34 = scalar_select %p31, %s33, %s24
      %p35 = scmp.ge.s32.totalorder %s34, 2
      %s36 = scalar_select %p35, 0, %s34
      %s37 = ssub.s32 %s24, %s36
      %s38 = ssub.s32 %s25, %s32
      %s39 = sor.u32 %s37, %s38
      %p40 = scmp.eq.s32.totalorder %s39, 0
      %s42 = sadd.s32 %s41, 1
      %s43 = scalar_select %p40, %s41, %s42
      %p46 = pneg %p40
      %p47 = scmp.eq.s32.totalorder %s17, 1
      %p48 = por %p46, %p47
      %p49 = scmp.ne.s32.totalorder %s41, %s44
      %p50 = scmp.eq.s32.totalorder %s17, 0
      %p51 = por %p49, %p50
      %p52 = scmp.ne.s32.totalorder %s41, %s44
      %p53 = scmp.eq.s32.totalorder %s22, 1
      %p54 = por %p52, %p53
      %p55 = scmp.ne.s32.totalorder %s44, %s45
      %p56 = scmp.eq.s32.totalorder %s22, 0
      %p57 = por %p55, %p56
      %p58 = scmp.ne.s32.totalorder %s44, %s45
      %p59 = scmp.eq.s32.totalorder %s23, 1
      %p60 = por %p58, %p59
      %p62 = scmp.ne.s32.totalorder %s45, %s61
      %p63 = scmp.eq.s32.totalorder %s23, 0
      %p64 = por %p62, %p63
      %s65 = ssub.s32 %s24, %s36
      %s66 = ssub.s32 %s25, %s32
      %s67 = sor.u32 %s65, %s66
      %p68 = scmp.eq.s32.totalorder %s67, 0
      %s70 = sadd.s32 %s69, 1
      %s71 = scalar_select %p68, %s69, %s70
      %p74 = pneg %p68
      %p75 = scmp.eq.s32.totalorder %s17, 1
      %p76 = por %p74, %p75
      %p77 = scmp.ne.s32.totalorder %s69, %s72
      %p78 = scmp.eq.s32.totalorder %s17, 0
      %p79 = por %p77, %p78
      %p80 = scmp.ne.s32.totalorder %s69, %s72
      %p81 = scmp.eq.s32.totalorder %s22, 1
      %p82 = por %p80, %p81
      %p83 = scmp.ne.s32.totalorder %s72, %s73
      %p84 = scmp.eq.s32.totalorder %s22, 0
      %p85 = por %p83, %p84
      %p86 = scmp.ne.s32.totalorder %s72, %s73
      %p87 = scmp.eq.s32.totalorder %s23, 1
      %p88 = por %p86, %p87
      %p90 = scmp.ne.s32.totalorder %s73, %s89
      %p91 = scmp.eq.s32.totalorder %s23, 0
      %p92 = por %p90, %p91
      %s93 = ssub.s32 %s24, %s36
      %p94 = scmp.eq.s32.totalorder %s93, 0
      %s96 = sadd.s32 %s95, 1
      %s97 = scalar_select %p94, %s95, %s96
      %p100 = pneg %p94
      %p101 = scmp.eq.s32.totalorder %s17, 1
      %p102 = por %p100, %p101
      %p103 = scmp.ne.s32.totalorder %s95, %s98
      %p104 = scmp.eq.s32.totalorder %s17, 0
      %p105 = por %p103, %p104
      %p106 = scmp.ne.s32.totalorder %s95, %s98
      %p107 = scmp.eq.s32.totalorder %s22, 1
      %p108 = por %p106, %p107
      %p109 = scmp.ne.s32.totalorder %s98, %s99
      %p110 = scmp.eq.s32.totalorder %s22, 0
      %p111 = por %p109, %p110
      %p112 = scmp.ne.s32.totalorder %s98, %s99
      %p113 = scmp.eq.s32.totalorder %s23, 1
      %p114 = por %p112, %p113
      %p116 = scmp.ne.s32.totalorder %s99, %s115
      %p117 = scmp.eq.s32.totalorder %s23, 0
      %p118 = por %p116, %p117
      %p119 = scmp.le.s32.totalorder 1, %s17
      %p120 = scmp.lt.s32.totalorder %s17, 3
      %p121 = pnand %p119, %p120
      %p122 = pneg %p121
      // Predicated region
      $region9: #{tpu_custom_call.1} parent=5 // pred_check
        _
      $region10: #{tpu_custom_call.1} parent=5 // pred_check_branch
        %124 = sbr.rel (%p121) target = $region12
      $region11: #{tpu_custom_call.1} parent=5 // pred_region
        %s125 = ssub.s32 %s17, 1
      $region12: #{tpu_custom_call.1} parent=5 // pred_fallthru
        _
      %p126 = scmp.lt.s32.totalorder %s17, 2
      // Predicated region
      $region13: #{tpu_custom_call.1} parent=5 // pred_check
        %p127 = pneg %p126
      $region14: #{tpu_custom_call.1} parent=5 // pred_check_branch
        %129 = sbr.rel (%p127) target = $region16
      $region15: #{tpu_custom_call.1} parent=5 // pred_region
        // Predicated region
        $region17: #{tpu_custom_call.1} parent=15 // pred_check
          %p130 = pneg %p51
        $region18: #{tpu_custom_call.1} parent=15 // pred_check_branch
          %132 = sbr.rel (%p130) target = $region20
        $region19: #{tpu_custom_call.1} parent=15 // pred_region
          %s133 = sand.u32 %s41, 1
          %s134 = scalar_lea.sflag [#allocation5], %s133
          %s135 = sand.u32 %s41, 1
          %s136 = smul.addr %s135, 8
          %s137 = scalar_lea.vmem [#allocation4], %s136
          %s139 = ssub.s32 128, 128
          %140 = vsyncadd %s134, %s139
          %s141 = smul.addr %s24, 4
          %s142 = sadd.s32 %s25, %s141
          %s143 = smul.addr %s142, 32
          %s144 = scalar_lea.hbm %s0, %s143
          %s145 = sshll.u32 %s137, 4
          %s146 = int_to_ptr.vmem [resolvable:$true] %s145
          %151 = dma.hbm_to_vmem [thread:$0]  %s144, 128, %s146, %s134, 32, 32, 2
        $region20: #{tpu_custom_call.1} parent=15 // pred_fallthru
          _
        // Predicated region
        $region21: #{tpu_custom_call.1} parent=15 // pred_check
          %p152 = pneg %p79
        $region22: #{tpu_custom_call.1} parent=15 // pred_check_branch
          %154 = sbr.rel (%p152) target = $region24
        $region23: #{tpu_custom_call.1} parent=15 // pred_region
          %s155 = sand.u32 %s69, 1
          %s156 = scalar_lea.sflag [#allocation8], %s155
          %s157 = sand.u32 %s69, 1
          %s158 = smul.addr %s157, 2
          %s159 = scalar_lea.vmem [#allocation7], %s158
          %s161 = ssub.s32 32, 32
          %162 = vsyncadd %s156, %s161
          %s163 = sadd.s32 %s25, %s24
          %s164 = smul.addr %s163, 32
          %s165 = scalar_lea.hbm %s1, %s164
          %s167 = sshll.u32 %s159, 4
          %s168 = int_to_ptr.vmem [resolvable:$true] %s167
          %170 = dma.hbm_to_vmem [thread:$0]  %s165, 32, %s168, %s156
        $region24: #{tpu_custom_call.1} parent=15 // pred_fallthru
          _
      $region16: #{tpu_custom_call.1} parent=5 // pred_fallthru
        _
      %p171 = scmp.le.s32.totalorder 1, %s17
      %p172 = scmp.lt.s32.totalorder %s17, 3
      %p173 = pnand %p171, %p172
      %p174 = pneg %p173
      // Predicated region
      $region25: #{tpu_custom_call.1} parent=5 // pred_check
        _
      $region26: #{tpu_custom_call.1} parent=5 // pred_check_branch
        %176 = sbr.rel (%p173) target = $region28
      $region27: #{tpu_custom_call.1} parent=5 // pred_region
        %s177 = ssub.s32 %s17, 1
        %s178 = sand.u32 %s44, 1
        %s179 = scalar_lea.sflag [#allocation5], %s178
        %s180 = sand.u32 %s44, 1
        %s181 = smul.addr %s180, 8
        %s182 = scalar_lea.vmem [#allocation4], %s181
        // Predicated region
        $region29: #{tpu_custom_call.1} parent=27 // pred_check
          %p183 = pneg %p57
        $region30: #{tpu_custom_call.1} parent=27 // pred_check_branch
          %185 = sbr.rel (%p183) target = $region32
        $region31: #{tpu_custom_call.1} parent=27 // pred_region
          %186 = dma.done %s179, 128
        $region32: #{tpu_custom_call.1} parent=27 // pred_fallthru
          _
        %s187 = sand.u32 %s72, 1
        %s188 = scalar_lea.sflag [#allocation8], %s187
        %s189 = sand.u32 %s72, 1
        %s190 = smul.addr %s189, 2
        %s191 = scalar_lea.vmem [#allocation7], %s190
        // Predicated region
        $region33: #{tpu_custom_call.1} parent=27 // pred_check
          %p192 = pneg %p85
        $region34: #{tpu_custom_call.1} parent=27 // pred_check_branch
          %194 = sbr.rel (%p192) target = $region36
        $region35: #{tpu_custom_call.1} parent=27 // pred_region
          %195 = dma.done %s188, 32
        $region36: #{tpu_custom_call.1} parent=27 // pred_fallthru
          _
        %s196 = sand.u32 %s44, 1
        %s197 = scalar_lea.sflag [#allocation5], %s196
        %s198 = sand.u32 %s44, 1
        %s199 = smul.addr %s198, 8
        %s200 = scalar_lea.vmem [#allocation4], %s199
        %p201 = pneg %p57
        %p202 = pneg %p54
        %s203 = sand.u32 %s72, 1
        %s204 = scalar_lea.sflag [#allocation8], %s203
        %s205 = sand.u32 %s72, 1
        %s206 = smul.addr %s205, 2
        %s207 = scalar_lea.vmem [#allocation7], %s206
        %p208 = pneg %p85
        %p209 = pneg %p82
        %p210 = pneg %p111
        %p211 = pneg %p108
        %s212 = sand.u32 %s98, 1
        %s213 = scalar_lea.sflag [#allocation6], %s212
        %s214 = sand.u32 %s98, 1
        %s215 = smul.addr %s214, 4
        %s216 = scalar_lea.vmem [#allocation9], %s215
        %p217 = scmp.eq.s32.totalorder %s27, 0
        // Predicated region
        $region37: #{tpu_custom_call.1} parent=27 // pred_check
          %p218 = pneg %p217
        $region38: #{tpu_custom_call.1} parent=27 // pred_check_branch
          %220 = sbr.rel (%p218) target = $region40
        $region39: #{tpu_custom_call.1} parent=27 // pred_region
          %221 = vst [vmem:[#allocation2] sm:$0xf] 0.0
          %s222 = scalar_lea.smem [#allocation3], 0
          %223 = sst [smem:[%s222]] 0.0
          %s224 = scalar_lea.smem [#allocation3], 1
          %225 = sst [smem:[%s224]] 0.0
          %s226 = scalar_lea.smem [#allocation3], 2
          %227 = sst [smem:[%s226]] 0.0
          %s228 = scalar_lea.smem [#allocation3], 3
          %229 = sst [smem:[%s228]] 0.0
          %s230 = scalar_lea.smem [#allocation3], 4
          %231 = sst [smem:[%s230]] 0.0
          %s232 = scalar_lea.smem [#allocation3], 5
          %233 = sst [smem:[%s232]] 0.0
          %s234 = scalar_lea.smem [#allocation3], 6
          %235 = sst [smem:[%s234]] 0.0
          %s236 = scalar_lea.smem [#allocation3], 7
          %237 = sst [smem:[%s236]] 0.0
        $region40: #{tpu_custom_call.1} parent=27 // pred_fallthru
          _
        %v238 = vld [vmem:[%s182] sm:$0x3]
        %v239 = vld [vmem:[%s182 + $0x2] sm:$0x3]
        %v240 = vld [vmem:[%s182 + $0x4] sm:$0x3]
        %v241 = vld [vmem:[%s182 + $0x6] sm:$0x3]
        %vm242 = vcmask 1041408
        %v243 = vsel %vm242, %v238, -inf
        %v244 = vsel %vm242, %v239, -inf
        %v245 = vsel %vm242, %v240, -inf
        %v246 = vsel %vm242, %v241, -inf
        %v247 = vmax.f32 %v243, %v244
        %v248 = vmax.f32 %v245, %v246
        %v249 = vmax.f32 %v247, %v248
        %v250 = vsub.f32 %v238, %v249
        %v251 = vsub.f32 %v239, %v249
        %v252 = vsub.f32 %v240, %v249
        %v253 = vsub.f32 %v241, %v249
        %v254 = vmul.f32 %v250, 1.442695
        %v255 = vpow.pop %v254
        %v256 = vmul.f32 %v251, 1.442695
        %v257 = vpow.pop %v256
        %v258 = vmul.f32 %v252, 1.442695
        %v259 = vpow.pop %v258
        %v260 = vmul.f32 %v253, 1.442695
        %v261 = vpow.pop %v260
        %v262 = vsel %vm242, %v255, 0.0
        %v263 = vsel %vm242, %v257, 0.0
        %v264 = vadd.f32 %v262, %v263
        %v265 = vsel %vm242, %v259, 0.0
        %v266 = vadd.f32 %v264, %v265
        %v267 = vsel %vm242, %v261, 0.0
        %v268 = vadd.f32 %v266, %v267
        %v269 = vrcp.pop %v268
        %v270 = vmul.f32 %v255, %v269
        %v271 = vmul.f32 %v257, %v269
        %v272 = vmul.f32 %v259, %v269
        %v273 = vmul.f32 %v261, %v269
        %v274 = vld [vmem:[#allocation2] sm:$0xf]
        %v275 = vsel %vm242, %v270, 0.0
        %v276 = vrot.slane %v275, 4
        %v277 = vadd.f32 %v275, %v276
        %v278 = vrot.slane %v277, 2
        %v279 = vadd.f32 %v277, %v278
        %v280 = vrot.slane %v279, 1
        %v281 = vadd.f32 %v279, %v280
        %v282 = vsel %vm242, %v271, 0.0
        %v283 = vrot.slane %v282, 4
        %v284 = vadd.f32 %v282, %v283
        %v285 = vrot.slane %v284, 2
        %v286 = vadd.f32 %v284, %v285
        %v287 = vrot.slane %v286, 1
        %v288 = vadd.f32 %v286, %v287
        %v289 = vsel %vm242, %v272, 0.0
        %v290 = vrot.slane %v289, 4
        %v291 = vadd.f32 %v289, %v290
        %v292 = vrot.slane %v291, 2
        %v293 = vadd.f32 %v291, %v292
        %v294 = vrot.slane %v293, 1
        %v295 = vadd.f32 %v293, %v294
        %v296 = vsel %vm242, %v273, 0.0
        %v297 = vrot.slane %v296, 4
        %v298 = vadd.f32 %v296, %v297
        %v299 = vrot.slane %v298, 2
        %v300 = vadd.f32 %v298, %v299
        %v301 = vrot.slane %v300, 1
        %v302 = vadd.f32 %v300, %v301
        %vm307 = vcmask 1041409
        %v308 = vsel %vm307, %v288, %v281
        %vm309 = vcmask 1042434
        %v310 = vsel %vm309, %v295, %v308
        %vm311 = vcmask 1043459
        %v312 = vsel %vm311, %v302, %v310
        %v314 = vadd.f32 %v274, %v312
        %315 = vst [vmem:[#allocation2] sm:$0xf] %v314
        %v316 = vld [vmem:[%s191] sm:$0x3]
        %s317 = sld [smem:[#allocation3]]
        %vm318 = vcmp.eq.s32.totalorder %v316, 0
        %v319 = vsel %vm318, 1, 0
        %v320 = vcvt.s32.f32 %v319
        %v321 = vsel %vm242, %v320, 0.0
        %322 = vadd.xlane.f32.xlu0 %v321
        %v323 = vpop.xlane.xlu0 %322
        %v324 = vrot.slane %v323, 4
        %v325 = vadd.f32 %v323, %v324
        %v326 = vrot.slane %v325, 2
        %v327 = vadd.f32 %v325, %v326
        %v328 = vrot.slane %v327, 1
        %v329 = vadd.f32 %v327, %v328
        %s330 = vtos %v329
        %s331 = sadd.f32 %s317, %s330
        %s332 = scalar_lea.smem [#allocation3], 0
        %333 = sst [smem:[%s332]] %s331
        %s334 = sld [smem:[#allocation3 + $0x1]]
        %vm335 = vcmp.eq.s32.totalorder %v316, 1
        %v336 = vsel %vm335, 1, 0
        %v337 = vcvt.s32.f32 %v336
        %v338 = vsel %vm242, %v337, 0.0
        %339 = vadd.xlane.f32.xlu0 %v338
        %v340 = vpop.xlane.xlu0 %339
        %v341 = vrot.slane %v340, 4
        %v342 = vadd.f32 %v340, %v341
        %v343 = vrot.slane %v342, 2
        %v344 = vadd.f32 %v342, %v343
        %v345 = vrot.slane %v344, 1
        %v346 = vadd.f32 %v344, %v345
        %s347 = vtos %v346
        %s348 = sadd.f32 %s334, %s347
        %s349 = scalar_lea.smem [#allocation3], 1
        %350 = sst [smem:[%s349]] %s348
        %s351 = sld [smem:[#allocation3 + $0x2]]
        %vm352 = vcmp.eq.s32.totalorder %v316, 2
        %v353 = vsel %vm352, 1, 0
        %v354 = vcvt.s32.f32 %v353
        %v355 = vsel %vm242, %v354, 0.0
        %356 = vadd.xlane.f32.xlu0 %v355
        %v357 = vpop.xlane.xlu0 %356
        %v358 = vrot.slane %v357, 4
        %v359 = vadd.f32 %v357, %v358
        %v360 = vrot.slane %v359, 2
        %v361 = vadd.f32 %v359, %v360
        %v362 = vrot.slane %v361, 1
        %v363 = vadd.f32 %v361, %v362
        %s364 = vtos %v363
        %s365 = sadd.f32 %s351, %s364
        %s366 = scalar_lea.smem [#allocation3], 2
        %367 = sst [smem:[%s366]] %s365
        %s368 = sld [smem:[#allocation3 + $0x3]]
        %vm369 = vcmp.eq.s32.totalorder %v316, 3
        %v370 = vsel %vm369, 1, 0
        %v371 = vcvt.s32.f32 %v370
        %v372 = vsel %vm242, %v371, 0.0
        %373 = vadd.xlane.f32.xlu0 %v372
        %v374 = vpop.xlane.xlu0 %373
        %v375 = vrot.slane %v374, 4
        %v376 = vadd.f32 %v374, %v375
        %v377 = vrot.slane %v376, 2
        %v378 = vadd.f32 %v376, %v377
        %v379 = vrot.slane %v378, 1
        %v380 = vadd.f32 %v378, %v379
        %s381 = vtos %v380
        %s382 = sadd.f32 %s368, %s381
        %s383 = scalar_lea.smem [#allocation3], 3
        %384 = sst [smem:[%s383]] %s382
        %s385 = sld [smem:[#allocation3 + $0x4]]
        %vm386 = vcmp.eq.s32.totalorder %v316, 4
        %v387 = vsel %vm386, 1, 0
        %v388 = vcvt.s32.f32 %v387
        %v389 = vsel %vm242, %v388, 0.0
        %390 = vadd.xlane.f32.xlu0 %v389
        %v391 = vpop.xlane.xlu0 %390
        %v392 = vrot.slane %v391, 4
        %v393 = vadd.f32 %v391, %v392
        %v394 = vrot.slane %v393, 2
        %v395 = vadd.f32 %v393, %v394
        %v396 = vrot.slane %v395, 1
        %v397 = vadd.f32 %v395, %v396
        %s398 = vtos %v397
        %s399 = sadd.f32 %s385, %s398
        %s400 = scalar_lea.smem [#allocation3], 4
        %401 = sst [smem:[%s400]] %s399
        %s402 = sld [smem:[#allocation3 + $0x5]]
        %vm403 = vcmp.eq.s32.totalorder %v316, 5
        %v404 = vsel %vm403, 1, 0
        %v405 = vcvt.s32.f32 %v404
        %v406 = vsel %vm242, %v405, 0.0
        %407 = vadd.xlane.f32.xlu0 %v406
        %v408 = vpop.xlane.xlu0 %407
        %v409 = vrot.slane %v408, 4
        %v410 = vadd.f32 %v408, %v409
        %v411 = vrot.slane %v410, 2
        %v412 = vadd.f32 %v410, %v411
        %v413 = vrot.slane %v412, 1
        %v414 = vadd.f32 %v412, %v413
        %s415 = vtos %v414
        %s416 = sadd.f32 %s402, %s415
        %s417 = scalar_lea.smem [#allocation3], 5
        %418 = sst [smem:[%s417]] %s416
        %s419 = sld [smem:[#allocation3 + $0x6]]
        %vm420 = vcmp.eq.s32.totalorder %v316, 6
        %v421 = vsel %vm420, 1, 0
        %v422 = vcvt.s32.f32 %v421
        %v423 = vsel %vm242, %v422, 0.0
        %424 = vadd.xlane.f32.xlu0 %v423
        %v425 = vpop.xlane.xlu0 %424
        %v426 = vrot.slane %v425, 4
        %v427 = vadd.f32 %v425, %v426
        %v428 = vrot.slane %v427, 2
        %v429 = vadd.f32 %v427, %v428
        %v430 = vrot.slane %v429, 1
        %v431 = vadd.f32 %v429, %v430
        %s432 = vtos %v431
        %s433 = sadd.f32 %s419, %s432
        %s434 = scalar_lea.smem [#allocation3], 6
        %435 = sst [smem:[%s434]] %s433
        %s436 = sld [smem:[#allocation3 + $0x7]]
        %vm437 = vcmp.eq.s32.totalorder %v316, 7
        %v438 = vsel %vm437, 1, 0
        %v439 = vcvt.s32.f32 %v438
        %v440 = vsel %vm242, %v439, 0.0
        %441 = vadd.xlane.f32.xlu0 %v440
        %v442 = vpop.xlane.xlu0 %441
        %v443 = vrot.slane %v442, 4
        %v444 = vadd.f32 %v442, %v443
        %v445 = vrot.slane %v444, 2
        %v446 = vadd.f32 %v444, %v445
        %v447 = vrot.slane %v446, 1
        %v448 = vadd.f32 %v446, %v447
        %s449 = vtos %v448
        %s450 = sadd.f32 %s436, %s449
        %s451 = scalar_lea.smem [#allocation3], 7
        %452 = sst [smem:[%s451]] %s450
        // Predicated region
        $region41: #{tpu_custom_call.1} parent=27 // pred_check
          %p453 = pneg %p217
        $region42: #{tpu_custom_call.1} parent=27 // pred_check_branch
          %455 = sbr.rel (%p453) target = $region44
        $region43: #{tpu_custom_call.1} parent=27 // pred_region
          %v456 = vld [vmem:[#allocation2] sm:$0xf]
          %458 = vrot.lane.b32.xlu0 %v456, 120
          %v459 = vpop.permute.xlu0 %458
          %v461 = vadd.f32 %v456, %v459
          %462 = vrot.lane.b32.xlu0 %v456, 112
          %v463 = vpop.permute.xlu0 %462
          %v465 = vadd.f32 %v461, %v463
          %466 = vrot.lane.b32.xlu0 %v456, 104
          %v467 = vpop.permute.xlu0 %466
          %v469 = vadd.f32 %v465, %v467
          %470 = vrot.lane.b32.xlu0 %v456, 96
          %v471 = vpop.permute.xlu0 %470
          %v473 = vadd.f32 %v469, %v471
          %474 = vrot.lane.b32.xlu0 %v456, 88
          %v475 = vpop.permute.xlu0 %474
          %v477 = vadd.f32 %v473, %v475
          %478 = vrot.lane.b32.xlu0 %v456, 80
          %v479 = vpop.permute.xlu0 %478
          %v481 = vadd.f32 %v477, %v479
          %482 = vrot.lane.b32.xlu0 %v456, 72
          %v483 = vpop.permute.xlu0 %482
          %v485 = vadd.f32 %v481, %v483
          %486 = vrot.lane.b32.xlu0 %v456, 64
          %v487 = vpop.permute.xlu0 %486
          %v489 = vadd.f32 %v485, %v487
          %490 = vrot.lane.b32.xlu0 %v456, 56
          %v491 = vpop.permute.xlu0 %490
          %v493 = vadd.f32 %v489, %v491
          %494 = vrot.lane.b32.xlu0 %v456, 48
          %v495 = vpop.permute.xlu0 %494
          %v497 = vadd.f32 %v493, %v495
          %498 = vrot.lane.b32.xlu0 %v456, 40
          %v499 = vpop.permute.xlu0 %498
          %v501 = vadd.f32 %v497, %v499
          %502 = vrot.lane.b32.xlu0 %v456, 32
          %v503 = vpop.permute.xlu0 %502
          %v505 = vadd.f32 %v501, %v503
          %506 = vrot.lane.b32.xlu0 %v456, 24
          %v507 = vpop.permute.xlu0 %506
          %v509 = vadd.f32 %v505, %v507
          %510 = vrot.lane.b32.xlu0 %v456, 16
          %v511 = vpop.permute.xlu0 %510
          %v513 = vadd.f32 %v509, %v511
          %514 = vrot.lane.b32.xlu0 %v456, 8
          %v515 = vpop.permute.xlu0 %514
          %v517 = vadd.f32 %v513, %v515
          %v518 = vlaneseq
          %v519 = vand.u32 %v518, 127
          %vm520 = vcmp.eq.s32.totalorder %v519, 0
          %s521 = sld [smem:[#allocation3]]
          %v522 = vstv %s521
          %v523 = vsel %vm520, %v522, 0.0
          %vm524 = vcmp.eq.s32.totalorder %v519, 1
          %s525 = sld [smem:[#allocation3 + $0x1]]
          %v526 = vstv %s525
          %v527 = vsel %vm524, %v526, %v523
          %vm528 = vcmp.eq.s32.totalorder %v519, 2
          %s529 = sld [smem:[#allocation3 + $0x2]]
          %v530 = vstv %s529
          %v531 = vsel %vm528, %v530, %v527
          %vm532 = vcmp.eq.s32.totalorder %v519, 3
          %s533 = sld [smem:[#allocation3 + $0x3]]
          %v534 = vstv %s533
          %v535 = vsel %vm532, %v534, %v531
          %vm536 = vcmp.eq.s32.totalorder %v519, 4
          %s537 = sld [smem:[#allocation3 + $0x4]]
          %v538 = vstv %s537
          %v539 = vsel %vm536, %v538, %v535
          %vm540 = vcmp.eq.s32.totalorder %v519, 5
          %s541 = sld [smem:[#allocation3 + $0x5]]
          %v542 = vstv %s541
          %v543 = vsel %vm540, %v542, %v539
          %vm544 = vcmp.eq.s32.totalorder %v519, 6
          %s545 = sld [smem:[#allocation3 + $0x6]]
          %v546 = vstv %s545
          %v547 = vsel %vm544, %v546, %v543
          %vm548 = vcmp.eq.s32.totalorder %v519, 7
          %s549 = sld [smem:[#allocation3 + $0x7]]
          %v550 = vstv %s549
          %v551 = vsel %vm548, %v550, %v547
          %v552 = vmul.f32 %v551, 0.9
          %v553 = vmul.f32 %v551, 1.1
          %vm554 = vcmp.lt.f32.partialorder %v517, %v552
          %v555 = vsel %vm554, 1, 0
          %v556 = vcvt.s32.f32 %v555
          %vm557 = vcmp.gt.f32.partialorder %v517, %v553
          %v558 = vsel %vm557, 1, 0
          %v559 = vcvt.s32.f32 %v558
          %v560 = vsub.f32 %v517, %v552
          %v561 = vmul.f32 %v560, %v560
          %v562 = vmul.f32 %v556, %v561
          %v563 = vsub.f32 %v517, %v553
          %v564 = vmul.f32 %v563, %v563
          %v565 = vmul.f32 %v559, %v564
          %v566 = vadd.f32 %v562, %v565
          %vm567 = vcmask 60416
          %568 = vst.msk [vmem:[%s216] sm:$0xf] %vm567, %v566
        $region44: #{tpu_custom_call.1} parent=27 // pred_fallthru
          _
        %s569 = sand.u32 %s98, 1
        %s570 = scalar_lea.sflag [#allocation6], %s569
        %s571 = sand.u32 %s98, 1
        %s572 = smul.addr %s571, 4
        %s573 = scalar_lea.vmem [#allocation9], %s572
        // Predicated region
        $region45: #{tpu_custom_call.1} parent=27 // pred_check
          %p574 = pneg %p108
        $region46: #{tpu_custom_call.1} parent=27 // pred_check_branch
          %576 = sbr.rel (%p574) target = $region48
        $region47: #{tpu_custom_call.1} parent=27 // pred_region
          %s578 = ssub.s32 64, 64
          %579 = vsyncadd %s570, %s578
          %s580 = smul.addr %s26, 64
          %s581 = scalar_lea.hbm %s2, %s580
          %s583 = sshll.u32 %s573, 4
          %s584 = int_to_ptr.vmem [resolvable:$true] %s583
          %586 = dma.vmem_to_hbm [thread:$0]  %s584, 64, %s581, %s570
        $region48: #{tpu_custom_call.1} parent=27 // pred_fallthru
          _
      $region28: #{tpu_custom_call.1} parent=5 // pred_fallthru
        _
      %p587 = scmp.le.s32.totalorder 2, %s17
      // Predicated region
      $region49: #{tpu_custom_call.1} parent=5 // pred_check
        %p588 = pneg %p587
      $region50: #{tpu_custom_call.1} parent=5 // pred_check_branch
        %590 = sbr.rel (%p588) target = $region52
      $region51: #{tpu_custom_call.1} parent=5 // pred_region
        %s591 = ssub.s32 %s17, 2
        // Predicated region
        $region53: #{tpu_custom_call.1} parent=51 // pred_check
          %p592 = pneg %p114
        $region54: #{tpu_custom_call.1} parent=51 // pred_check_branch
          %594 = sbr.rel (%p592) target = $region56
        $region55: #{tpu_custom_call.1} parent=51 // pred_region
          %s595 = sand.u32 %s99, 1
          %s596 = scalar_lea.sflag [#allocation6], %s595
          %s597 = sand.u32 %s99, 1
          %s598 = smul.addr %s597, 4
          %s599 = scalar_lea.vmem [#allocation9], %s598
          %600 = dma.done %s596, 64
        $region56: #{tpu_custom_call.1} parent=51 // pred_fallthru
          _
      $region52: #{tpu_custom_call.1} parent=5 // pred_fallthru
        _
    $region6: #{tpu_custom_call.1} parent=1 // loop_footer
      %s21 = sadd.s32 1, %s17
    $region7: #{tpu_custom_call.1} parent=1 // loop_footer_branch
      %16 = sbr.rel target = $region3
    $region8: #{tpu_custom_call.1} parent=1 // loop_exit
      _
    %601 = vsyncpa [#allocation5], 1
    %s602 = scalar_lea.sflag [#allocation5], 1
    %603 = vsyncpa %s602, 1
    %604 = vsyncpa [#allocation8], 1
    %s605 = scalar_lea.sflag [#allocation8], 1
    %606 = vsyncpa %s605, 1
    %607 = vsyncpa [#allocation6], 1
    %s608 = scalar_lea.sflag [#allocation6], 1
    %609 = vsyncpa %s608, 1

</llo_original>
